<compile_context>
chip_gen: v6e
topology: v6e:2x2x1
jax: 0.10.0
libtpu: 0.0.40
codegen_flags: <defaults>
</compile_context>

<pallas_src>
import jax
import jax.numpy as jnp
from jax import lax
from jax.experimental import pallas as pl
from jax.experimental.pallas import tpu as pltpu

_LANE = 128


def _round_up(x, m):
    return (x + m - 1) // m * m


def _pick_row_tile(M):
    """Outer row tile over the flattened H*W axis (multiple of 8)."""
    if M <= 2048:
        return _round_up(M, 8)
    for t in (2048, 1024, 512, 256):
        if M % t == 0:
            return t
    return 1024


def _pick_sub_tile(TM):
    """Inner sub-tile rows per MXU dot; keeps each f32 dot result <= 64 KiB."""
    for s in (128, 64, 32, 16, 8):
        if TM % s == 0:
            return s
    return TM


def _make_kernel(sub):
    def kernel(dscale_ref, x_ref, w_ref, e_ref, scale_ref, bias_ref, o_ref):
        """One grid step = one (sample n, row-tile m) of the flattened H*W axis.

        dscale_ref : (N,)        SMEM f32   per-sample drop_path scale (mask/keep_prob)
        x_ref      : (TM, Kp)    bf16       im2col rows (9 taps folded into lanes)
        w_ref      : (Kp, Coutp) bf16       folded conv weight
        e_ref      : (Kp, Coutp) bf16       one-hot center-tap selector (identity op)
        scale_ref  : (1, Coutp)  f32        affine norm scale
        bias_ref   : (1, Coutp)  f32        affine norm bias
        o_ref      : (TM, Coutp) bf16
        """
        n = pl.program_id(0)
        # drop_path folded into the per-sample affine constants; hoisted so the
        # (1, Coutp) broadcasts are built once, not per sub-tile.
        ds = dscale_ref[n]
        s = scale_ref[...] * ds
        b = bias_ref[...] * ds
        num_sub = o_ref.shape[0] // sub

        def body(i, carry):
            r0 = pl.multiple_of(i * sub, sub)
            xs = x_ref[pl.ds(r0, sub), :]                              # (sub, Kp) bf16
            conv = jnp.dot(xs, w_ref[...],
                           preferred_element_type=jnp.float32)         # (sub, Coutp) f32
            xid = jnp.dot(xs, e_ref[...],
                          preferred_element_type=jnp.float32)          # identity branch
            out = conv * s + b + xid                                   # f32 epilogue
            o_ref[pl.ds(r0, sub), :] = out.astype(o_ref.dtype)
            return carry

        lax.fori_loop(0, num_sub, body, 0, unroll=(num_sub <= 8))

    return kernel


def mixed_op_forward(x_nchw, w, scale, bias, *, is_drop_path=False,
                     drop_prob=0.0, layer_rate=0.0, step_rate=0.0, rng=None):
    """Mixed_OP.forward.  x_nchw: (N, C, H, W) f32.  Returns (out, mask, keep_prob)."""
    N, C, H, W = x_nchw.shape
    Cout, Cin, kh, kw = w.shape
    assert (kh, kw) == (3, 3)
    # skip_connect (Identity) requires inplanes == outplanes; other OPS
    # candidates with channel expansion are out of scope for this pair.
    assert Cin == C and Cout == C, "skip_connect (Identity) requires inplanes == outplanes"

    K = 9 * Cin
    Kp = _round_up(K, _LANE)
    Coutp = _round_up(Cout, _LANE)

    M = H * W
    TM = _pick_row_tile(M)
    Mpad = _round_up(M, TM)
    SUB = _pick_sub_tile(TM)

    # ---- layout plumbing (XLA-side, once per call): im2col + lane pad ----
    x_nhwc = jnp.transpose(x_nchw, (0, 2, 3, 1))                        # NHWC
    xp = jnp.pad(x_nhwc, ((0, 0), (1, 1), (1, 1), (0, 0)))              # spatial halo
    # tap-major column order: col = (3*dy + dx) * Cin + cin
    taps = [xp[:, dy:dy + H, dx:dx + W, :] for dy in range(3) for dx in range(3)]
    x_cols = jnp.concatenate(taps, axis=-1).reshape(N, M, K)
    x_cols = jnp.pad(x_cols, ((0, 0), (0, Mpad - M), (0, Kp - K)))
    x_cols = x_cols.astype(jnp.bfloat16)

    # (Cout,Cin,3,3) -> (3,3,Cin,Cout) -> (9*Cin, Cout); row order matches x_cols.
    w_mat = jnp.transpose(w, (2, 3, 1, 0)).reshape(K, Cout)
    w_mat = jnp.pad(w_mat, ((0, Kp - K), (0, Coutp - Cout))).astype(jnp.bfloat16)

    # one-hot selector: center tap (dy=dx=1 -> tap 4) channel c -> output channel c.
    ids = jnp.arange(Cout)
    e_mat = jnp.zeros((Kp, Coutp), jnp.float32).at[4 * Cin + ids, ids].set(1.0)
    e_mat = e_mat.astype(jnp.bfloat16)

    scale_p = jnp.pad(scale.astype(jnp.float32), (0, Coutp - Cout)).reshape(1, Coutp)
    bias_p = jnp.pad(bias.astype(jnp.float32), (0, Coutp - Cout)).reshape(1, Coutp)

    # ---- drop_path scalars (same arithmetic as the torch helper) ----
    if is_drop_path and drop_prob > 0.0:
        kp = 1.0 - drop_prob
        kp = 1.0 - layer_rate * (1.0 - kp)
        kp = 1.0 - step_rate * (1.0 - kp)
        mask = jax.random.bernoulli(rng, p=kp, shape=(N,)).astype(jnp.float32)
        keep_prob = jnp.full((1,), kp, jnp.float32)
    else:
        mask = jnp.ones((N,), jnp.float32)
        keep_prob = jnp.ones((1,), jnp.float32)
    dscale = (mask / keep_prob[0]).astype(jnp.float32)                  # (N,)

    n_m = Mpad // TM

    # VMEM budget: double-buffered x / out row windows + resident constants.
    x_blk = TM * Kp * 2
    o_blk = TM * Coutp * 2
    const = 2 * Kp * Coutp * 2 + 2 * Coutp * 4
    vmem_limit = int(min(max(2 * (x_blk + o_blk) + 2 * const + (1 << 20), 8 << 20),
                         64 << 20))

    cost = pl.CostEstimate(
        flops=2 * N * Mpad * Kp * Coutp * 2,        # conv dot + identity-selector dot
        transcendentals=0,
        bytes_accessed=N * Mpad * (Kp + Coutp) * 2 + 2 * Kp * Coutp * 2)

    out = pl.pallas_call(
        _make_kernel(SUB),
        out_shape=jax.ShapeDtypeStruct((N, Mpad, Coutp), jnp.bfloat16),
        grid=(N, n_m),
        in_specs=[
            pl.BlockSpec(memory_space=pltpu.SMEM),                       # dscale (N,)
            pl.BlockSpec((None, TM, Kp), lambda n, m: (n, m, 0)),        # im2col rows
            pl.BlockSpec((Kp, Coutp), lambda n, m: (0, 0)),              # conv weight
            pl.BlockSpec((Kp, Coutp), lambda n, m: (0, 0)),              # identity selector
            pl.BlockSpec((1, Coutp), lambda n, m: (0, 0)),               # affine scale
            pl.BlockSpec((1, Coutp), lambda n, m: (0, 0)),               # affine bias
        ],
        out_specs=pl.BlockSpec((None, TM, Coutp), lambda n, m: (n, m, 0)),
        compiler_params=pltpu.CompilerParams(
            dimension_semantics=("parallel", "parallel"),
            vmem_limit_bytes=vmem_limit),
        cost_estimate=cost,
    )(dscale, x_cols, w_mat, e_mat, scale_p, bias_p)

    # Strip row/lane padding BEFORE the layout transpose so XLA never does a
    # full pass over the 128-channel-padded slab.
    out = out[:, :M, :Cout].reshape(N, H, W, Cout)
    out = jnp.transpose(out, (0, 3, 1, 2)).astype(jnp.float32)           # back to NCHW
    return out, mask, keep_prob


def _reference(x_nchw, w, scale, bias, mask, keep_prob):
    """Plain-JAX reference.  Inputs are bf16-rounded (kernel's MXU feed) and the
    final result is bf16-rounded (kernel stores bf16)."""
    xq = x_nchw.astype(jnp.bfloat16).astype(jnp.float32)
    wq = w.astype(jnp.bfloat16).astype(jnp.float32)
    conv = lax.conv_general_dilated(
        xq, wq, window_strides=(1, 1), padding="SAME",
        dimension_numbers=("NCHW", "OIHW", "NCHW"),
        precision=lax.Precision.HIGHEST)
    conv = conv * scale.reshape(1, -1, 1, 1) + bias.reshape(1, -1, 1, 1)
    conv = conv / keep_prob[0] * mask.reshape(-1, 1, 1, 1)
    out = conv + xq
    return out.astype(jnp.bfloat16).astype(jnp.float32)


if __name__ == "__main__":
    key = jax.random.PRNGKey(0)
    k_x, k_w, k_s, k_b, k_dp = jax.random.split(key, 5)

    N, C, H, W = 2, 4, 16, 16
    inplanes = outplanes = C

    x = jax.random.normal(k_x, (N, C, H, W), jnp.float32)
    w = 0.1 * jax.random.normal(k_w, (outplanes, inplanes, 3, 3), jnp.float32)
    scale = 1.0 + 0.05 * jax.random.normal(k_s, (outplanes,), jnp.float32)
    bias = 0.05 * jax.random.normal(k_b, (outplanes,), jnp.float32)

    # Path 1: plain sum of ops (is_drop_path=False)
    out0, m0, kp0 = mixed_op_forward(x, w, scale, bias, is_drop_path=False)
    out0 = jax.block_until_ready(out0)
    ref0 = _reference(x, w, scale, bias, m0, kp0)
    assert jnp.allclose(out0, ref0, atol=1e-2, rtol=1e-2), "no-drop-path mismatch"

    # Path 2: drop_path applied to the non-Identity op only
    out1, m1, kp1 = mixed_op_forward(
        x, w, scale, bias, is_drop_path=True,
        drop_prob=0.3, layer_rate=0.5, step_rate=0.5, rng=k_dp)
    out1 = jax.block_until_ready(out1)
    ref1 = _reference(x, w, scale, bias, m1, kp1)
    assert jnp.allclose(out1, ref1, atol=1e-2, rtol=1e-2), "drop-path mismatch"

    print("KERNEL_OK")
</pallas_src>

<mosaic_0001>
module attributes {stable_mosaic.version = 11 : i64} {
  func.func @kernel(%arg0: i32, %arg1: i32, %arg2: memref<2xf32, #tpu.memory_space<smem>>, %arg3: memref<1x256x128xbf16, #tpu.memory_space<vmem>>, %arg4: memref<128x128xbf16, #tpu.memory_space<vmem>>, %arg5: memref<128x128xbf16, #tpu.memory_space<vmem>>, %arg6: memref<1x128xf32, #tpu.memory_space<vmem>>, %arg7: memref<1x128xf32, #tpu.memory_space<vmem>>, %arg8: memref<1x256x128xbf16, #tpu.memory_space<vmem>>) attributes {dimension_semantics = [#tpu.dimension_semantics<parallel>, #tpu.dimension_semantics<parallel>], iteration_bounds = array<i64: 2, 1>, scalar_prefetch = 0 : i64, scratch_operands = 0 : i64, tpu.core_type = #tpu.core_type<tc>, window_params = [{transform_indices = @transform_0, window_bounds = array<i64: 2>}, {transform_indices = @transform_1, window_bounds = array<i64: 1, 256, 128>}, {pipeline_mode = #tpu.pipeline_mode<synchronous>, transform_indices = @transform_2, window_bounds = array<i64: 128, 128>}, {pipeline_mode = #tpu.pipeline_mode<synchronous>, transform_indices = @transform_3, window_bounds = array<i64: 128, 128>}, {pipeline_mode = #tpu.pipeline_mode<synchronous>, transform_indices = @transform_4, window_bounds = array<i64: 1, 128>}, {pipeline_mode = #tpu.pipeline_mode<synchronous>, transform_indices = @transform_5, window_bounds = array<i64: 1, 128>}, {transform_indices = @transform_6, window_bounds = array<i64: 1, 256, 128>}]} {
    %0 = arith.index_cast %arg0 : i32 to index
    %1 = memref.load %arg2[%0] : memref<2xf32, #tpu.memory_space<smem>>
    %c0 = arith.constant 0 : index
    %c0_0 = arith.constant 0 : index
    %2 = vector.load %arg6[%c0, %c0_0] : memref<1x128xf32, #tpu.memory_space<vmem>>, vector<1x128xf32>
    %3 = vector.broadcast %1 : f32 to vector<1x128xf32>
    %4 = arith.mulf %2, %3 : vector<1x128xf32>
    %c0_1 = arith.constant 0 : index
    %c0_2 = arith.constant 0 : index
    %5 = vector.load %arg7[%c0_1, %c0_2] : memref<1x128xf32, #tpu.memory_space<vmem>>, vector<1x128xf32>
    %6 = vector.broadcast %1 : f32 to vector<1x128xf32>
    %7 = arith.mulf %5, %6 : vector<1x128xf32>
    %c0_i32 = arith.constant 0 : i32
    %c128_i32 = arith.constant 128 : i32
    %8 = arith.muli %c0_i32, %c128_i32 : i32
    %9 = tpu.assume_multiple %8, 128 : i32
    %c0_3 = arith.constant 0 : index
    %10 = arith.index_cast %9 : i32 to index
    %c0_4 = arith.constant 0 : index
    %11 = vector.load %arg3[%c0_3, %10, %c0_4] : memref<1x256x128xbf16, #tpu.memory_space<vmem>>, vector<1x128x128xbf16>
    %12 = vector.shape_cast %11 : vector<1x128x128xbf16> to vector<128x128xbf16>
    %c0_5 = arith.constant 0 : index
    %c0_6 = arith.constant 0 : index
    %13 = vector.load %arg4[%c0_5, %c0_6] : memref<128x128xbf16, #tpu.memory_space<vmem>>, vector<128x128xbf16>
    %cst = arith.constant dense<0.000000e+00> : vector<128x128xf32>
    %14 = tpu.matmul %12, %13, %cst {dimension_numbers = #tpu.dot_dimension_numbers<[1], [0], [0], [1], [0, 0, 1, 1], [], []>} : vector<128x128xbf16>, vector<128x128xbf16>, vector<128x128xf32> -> vector<128x128xf32>
    %c0_7 = arith.constant 0 : index
    %c0_8 = arith.constant 0 : index
    %15 = vector.load %arg5[%c0_7, %c0_8] : memref<128x128xbf16, #tpu.memory_space<vmem>>, vector<128x128xbf16>
    %cst_9 = arith.constant dense<0.000000e+00> : vector<128x128xf32>
    %16 = tpu.matmul %12, %15, %cst_9 {dimension_numbers = #tpu.dot_dimension_numbers<[1], [0], [0], [1], [0, 0, 1, 1], [], []>} : vector<128x128xbf16>, vector<128x128xbf16>, vector<128x128xf32> -> vector<128x128xf32>
    %17 = vector.broadcast %4 : vector<1x128xf32> to vector<128x128xf32>
    %18 = arith.mulf %14, %17 : vector<128x128xf32>
    %19 = vector.broadcast %7 : vector<1x128xf32> to vector<128x128xf32>
    %20 = arith.addf %18, %19 : vector<128x128xf32>
    %21 = arith.addf %20, %16 : vector<128x128xf32>
    %22 = arith.truncf %21 : vector<128x128xf32> to vector<128x128xbf16>
    %c0_10 = arith.constant 0 : index
    %23 = arith.index_cast %9 : i32 to index
    %c0_11 = arith.constant 0 : index
    %24 = vector.load %arg8[%c0_10, %23, %c0_11] : memref<1x256x128xbf16, #tpu.memory_space<vmem>>, vector<1x128x128xbf16>
    %25 = vector.shape_cast %24 : vector<1x128x128xbf16> to vector<128x128xbf16>
    %26 = vector.shape_cast %22 : vector<128x128xbf16> to vector<1x128x128xbf16>
    tpu.vector_store %arg8[%c0_10, %23, %c0_11], %26 {strides = array<i32>} : memref<1x256x128xbf16, #tpu.memory_space<vmem>>, vector<1x128x128xbf16>,
    %c1_i32 = arith.constant 1 : i32
    %c128_i32_12 = arith.constant 128 : i32
    %27 = arith.muli %c1_i32, %c128_i32_12 : i32
    %28 = tpu.assume_multiple %27, 128 : i32
    %c0_13 = arith.constant 0 : index
    %29 = arith.index_cast %28 : i32 to index
    %c0_14 = arith.constant 0 : index
    %30 = vector.load %arg3[%c0_13, %29, %c0_14] : memref<1x256x128xbf16, #tpu.memory_space<vmem>>, vector<1x128x128xbf16>
    %31 = vector.shape_cast %30 : vector<1x128x128xbf16> to vector<128x128xbf16>
    %c0_15 = arith.constant 0 : index
    %c0_16 = arith.constant 0 : index
    %32 = vector.load %arg4[%c0_15, %c0_16] : memref<128x128xbf16, #tpu.memory_space<vmem>>, vector<128x128xbf16>
    %cst_17 = arith.constant dense<0.000000e+00> : vector<128x128xf32>
    %33 = tpu.matmul %31, %32, %cst_17 {dimension_numbers = #tpu.dot_dimension_numbers<[1], [0], [0], [1], [0, 0, 1, 1], [], []>} : vector<128x128xbf16>, vector<128x128xbf16>, vector<128x128xf32> -> vector<128x128xf32>
    %c0_18 = arith.constant 0 : index
    %c0_19 = arith.constant 0 : index
    %34 = vector.load %arg5[%c0_18, %c0_19] : memref<128x128xbf16, #tpu.memory_space<vmem>>, vector<128x128xbf16>
    %cst_20 = arith.constant dense<0.000000e+00> : vector<128x128xf32>
    %35 = tpu.matmul %31, %34, %cst_20 {dimension_numbers = #tpu.dot_dimension_numbers<[1], [0], [0], [1], [0, 0, 1, 1], [], []>} : vector<128x128xbf16>, vector<128x128xbf16>, vector<128x128xf32> -> vector<128x128xf32>
    %36 = vector.broadcast %4 : vector<1x128xf32> to vector<128x128xf32>
    %37 = arith.mulf %33, %36 : vector<128x128xf32>
    %38 = vector.broadcast %7 : vector<1x128xf32> to vector<128x128xf32>
    %39 = arith.addf %37, %38 : vector<128x128xf32>
    %40 = arith.addf %39, %35 : vector<128x128xf32>
    %41 = arith.truncf %40 : vector<128x128xf32> to vector<128x128xbf16>
    %c0_21 = arith.constant 0 : index
    %42 = arith.index_cast %28 : i32 to index
    %c0_22 = arith.constant 0 : index
    %43 = vector.load %arg8[%c0_21, %42, %c0_22] : memref<1x256x128xbf16, #tpu.memory_space<vmem>>, vector<1x128x128xbf16>
    %44 = vector.shape_cast %43 : vector<1x128x128xbf16> to vector<128x128xbf16>
    %45 = vector.shape_cast %41 : vector<128x128xbf16> to vector<1x128x128xbf16>
    tpu.vector_store %arg8[%c0_21, %42, %c0_22], %45 {strides = array<i32>} : memref<1x256x128xbf16, #tpu.memory_space<vmem>>, vector<1x128x128xbf16>,
    %c2_i32 = arith.constant 2 : i32
    return
  }
  func.func @transform_0(%arg0: i32, %arg1: i32) -> i32 {
    %c0_i32 = arith.constant 0 : i32
    %c0_i32_0 = arith.constant 0 : i32
    return %c0_i32 : i32
  }
  func.func @transform_1(%arg0: i32, %arg1: i32) -> (i32, i32, i32) {
    %c0_i32 = arith.constant 0 : i32
    %c0_i32_0 = arith.constant 0 : i32
    return %arg0, %arg1, %c0_i32 : i32, i32, i32
  }
  func.func @transform_2(%arg0: i32, %arg1: i32) -> (i32, i32) {
    %c0_i32 = arith.constant 0 : i32
    %c0_i32_0 = arith.constant 0 : i32
    %c0_i32_1 = arith.constant 0 : i32
    return %c0_i32, %c0_i32_0 : i32, i32
  }
  func.func @transform_3(%arg0: i32, %arg1: i32) -> (i32, i32) {
    %c0_i32 = arith.constant 0 : i32
    %c0_i32_0 = arith.constant 0 : i32
    %c0_i32_1 = arith.constant 0 : i32
    return %c0_i32, %c0_i32_0 : i32, i32
  }
  func.func @transform_4(%arg0: i32, %arg1: i32) -> (i32, i32) {
    %c0_i32 = arith.constant 0 : i32
    %c0_i32_0 = arith.constant 0 : i32
    %c0_i32_1 = arith.constant 0 : i32
    return %c0_i32, %c0_i32_0 : i32, i32
  }
  func.func @transform_5(%arg0: i32, %arg1: i32) -> (i32, i32) {
    %c0_i32 = arith.constant 0 : i32
    %c0_i32_0 = arith.constant 0 : i32
    %c0_i32_1 = arith.constant 0 : i32
    return %c0_i32, %c0_i32_0 : i32, i32
  }
  func.func @transform_6(%arg0: i32, %arg1: i32) -> (i32, i32, i32) {
    %c0_i32 = arith.constant 0 : i32
    %c0_i32_0 = arith.constant 0 : i32
    return %arg0, %arg1, %c0_i32 : i32, i32, i32
  }
}

</mosaic_0001>

<llo_original>
// kernel: tpu_custom_call.1
$region0: #{tpu_custom_call.1}
  #allocation0 [shape = 'u32[]', space=smem, size = 0x4, offset = 0x4, fixed_abs, tag = 'smem constant byte address 0x4 - core index']
  #allocation1 [shape = 'u32[144,128]{1,0:T(1,128)}', space=vmem, size = 0x12000, scoped, tag = 'internal scratch']
  %s0 = inlined_call_operand.hbm [shape: f32[2], index: 0, kind: input, shape index: {}]
  %s1 = inlined_call_operand.hbm [shape: bf16[2,256,128], index: 1, kind: input, shape index: {}]
  %s2 = inlined_call_operand.hbm [shape: bf16[128,128], index: 2, kind: input, shape index: {}]
  %s3 = inlined_call_operand.hbm [shape: bf16[128,128], index: 3, kind: input, shape index: {}]
  %s4 = inlined_call_operand.vmem [shape: f32[1,128], index: 4, kind: input, shape index: {}]
  %s5 = inlined_call_operand.vmem [shape: f32[1,128], index: 5, kind: input, shape index: {}]
  %s6 = inlined_call_operand.hbm [shape: bf16[2,256,128], index: 6, kind: output, shape index: {}]
  %s7 = sld [smem:[#allocation0]]
  $region73: #{tpu_custom_call.1} parent=0
    _
  %s9 = ssub.s32 1, %s7
  %s10 = scalar_select 0, %s9, %s7
  $region1: #{tpu_custom_call.1} parent=0
    #allocation2 [shape = 'u8[512]{0}', space=smem, size = 0x200, scoped, tag = 'input window, operand 0, single buffered']
    #allocation3 [shape = 's32[2]{0}', space=sflag, size = 0x8, scoped, tag = 'scoped memory for tpu_custom_call.1']
    #allocation4 [shape = 's32[2]{0}', space=sflag, size = 0x8, scoped, tag = 'scoped memory for tpu_custom_call.1']
    #allocation5 [shape = 's32[2]{0}', space=sflag, size = 0x8, scoped, tag = 'scoped memory for tpu_custom_call.1']
    #allocation6 [shape = 'u8[131072]{0}', space=vmem, size = 0x20000, scoped, tag = 'input window, operand 1']
    #allocation7 [shape = 'u8[32768]{0}', space=vmem, size = 0x8000, scoped, tag = 'input window, operand 2, single buffered']
    #allocation8 [shape = 's32[1]{0}', space=sflag, size = 0x4, scoped, tag = 'scoped memory for tpu_custom_call.1']
    #allocation9 [shape = 'u8[32768]{0}', space=vmem, size = 0x8000, scoped, tag = 'input window, operand 3, single buffered']
    #allocation10 [shape = 'u8[131072]{0}', space=vmem, size = 0x20000, scoped, tag = 'output window, operand 0']
    %11 = vsyncpa [#allocation5], 0
    %12 = vsyncpa [#allocation3], 0
    %s13 = scalar_lea.sflag [#allocation3], 1
    %14 = vsyncpa %s13, 0
    %15 = vsyncpa [#allocation8], 0
    %16 = vsyncpa [#allocation4], 0
    %s17 = scalar_lea.sflag [#allocation4], 1
    %18 = vsyncpa %s17, 0
    loop: start=0, step=1, limit=4
    $region2: #{tpu_custom_call.1} parent=1 // loop_pre_header
      _
    $region3: #{tpu_custom_call.1} parent=1 // loop_header
      %s20 = sphi 0, %s24
      %p21 = scmp.ge.s32.totalorder %s20, 4
      %s27 = sphi 0, %s39
      %s28 = sphi 0, %s35
      %s29 = sphi 0, %s27
      %s30 = sphi 0, %s28
      %s31 = sphi 0, %s29
      %s32 = sphi 0, %s30
      %s40 = sphi 0, %s40
      %s42 = sphi 0, %s40
      %s43 = sphi 0, %s42
      %s57 = sphi 0, %s43
      %s65 = sphi 0, %s67
      %s68 = sphi 0, %s65
      %s69 = sphi 0, %s68
      %s85 = sphi 0, %s69
      %s89 = sphi 0, %s89
      %s91 = sphi 0, %s89
      %s92 = sphi 0, %s91
      %s106 = sphi 0, %s92
      %s110 = sphi 0, %s110
      %s112 = sphi 0, %s110
      %s113 = sphi 0, %s112
      %s127 = sphi 0, %s113
      %s131 = sphi 0, %s131
      %s133 = sphi 0, %s131
      %s134 = sphi 0, %s133
      %s148 = sphi 0, %s134
      %s152 = sphi 0, %s152
      %s154 = sphi 0, %s152
      %s155 = sphi 0, %s154
      %s169 = sphi 0, %s155
      %s177 = sphi 0, %s179
      %s180 = sphi 0, %s177
      %s181 = sphi 0, %s180
      %s197 = sphi 0, %s181
    $region4: #{tpu_custom_call.1} parent=1 // loop_header_branch
      %23 = sbr.rel (%p21) target = $region8
    $region5: #{tpu_custom_call.1} parent=1 // loop_body
      %s25 = ssub.s32 %s20, 1
      %s26 = ssub.s32 %s20, 2
      %s33 = sadd.s32 1, %s28
      %p34 = scmp.ge.s32.totalorder %s33, 1
      %s35 = scalar_select %p34, 0, %s33
      %s36 = sadd.s32 1, %s27
      %s37 = scalar_select %p34, %s36, %s27
      %p38 = scmp.ge.s32.totalorder %s37, 2
      %s39 = scalar_select %p38, 0, %s37
      %s41 = sadd.s32 %s40, 1
      %p44 = scmp.eq.s32.totalorder %s20, 1
      %p45 = scmp.ne.s32.totalorder %s40, %s42
      %p46 = scmp.eq.s32.totalorder %s20, 0
      %p47 = por %p45, %p46
      %p48 = scmp.ne.s32.totalorder %s40, %s42
      %p49 = scmp.eq.s32.totalorder %s25, 1
      %p50 = por %p48, %p49
      %p51 = scmp.ne.s32.totalorder %s42, %s43
      %p52 = scmp.eq.s32.totalorder %s25, 0
      %p53 = por %p51, %p52
      %p54 = scmp.ne.s32.totalorder %s42, %s43
      %p55 = scmp.eq.s32.totalorder %s26, 1
      %p56 = por %p54, %p55
      %p58 = scmp.ne.s32.totalorder %s43, %s57
      %p59 = scmp.eq.s32.totalorder %s26, 0
      %p60 = por %p58, %p59
      %s61 = ssub.s32 %s27, %s39
      %s62 = ssub.s32 %s28, %s35
      %s63 = sor.u32 %s61, %s62
      %p64 = scmp.eq.s32.totalorder %s63, 0
      %s66 = sadd.s32 %s65, 1
      %s67 = scalar_select %p64, %s65, %s66
      %p70 = pneg %p64
      %p71 = scmp.eq.s32.totalorder %s20, 1
      %p72 = por %p70, %p71
      %p73 = scmp.ne.s32.totalorder %s65, %s68
      %p74 = scmp.eq.s32.totalorder %s20, 0
      %p75 = por %p73, %p74
      %p76 = scmp.ne.s32.totalorder %s65, %s68
      %p77 = scmp.eq.s32.totalorder %s25, 1
      %p78 = por %p76, %p77
      %p79 = scmp.ne.s32.totalorder %s68, %s69
      %p80 = scmp.eq.s32.totalorder %s25, 0
      %p81 = por %p79, %p80
      %p82 = scmp.ne.s32.totalorder %s68, %s69
      %p83 = scmp.eq.s32.totalorder %s26, 1
      %p84 = por %p82, %p83
      %p86 = scmp.ne.s32.totalorder %s69, %s85
      %p87 = scmp.eq.s32.totalorder %s26, 0
      %p88 = por %p86, %p87
      %s90 = sadd.s32 %s89, 1
      %p93 = scmp.eq.s32.totalorder %s20, 1
      %p94 = scmp.ne.s32.totalorder %s89, %s91
      %p95 = scmp.eq.s32.totalorder %s20, 0
      %p96 = por %p94, %p95
      %p97 = scmp.ne.s32.totalorder %s89, %s91
      %p98 = scmp.eq.s32.totalorder %s25, 1
      %p99 = por %p97, %p98
      %p100 = scmp.ne.s32.totalorder %s91, %s92
      %p101 = scmp.eq.s32.totalorder %s25, 0
      %p102 = por %p100, %p101
      %p103 = scmp.ne.s32.totalorder %s91, %s92
      %p104 = scmp.eq.s32.totalorder %s26, 1
      %p105 = por %p103, %p104
      %p107 = scmp.ne.s32.totalorder %s92, %s106
      %p108 = scmp.eq.s32.totalorder %s26, 0
      %p109 = por %p107, %p108
      %s111 = sadd.s32 %s110, 1
      %p114 = scmp.eq.s32.totalorder %s20, 1
      %p115 = scmp.ne.s32.totalorder %s110, %s112
      %p116 = scmp.eq.s32.totalorder %s20, 0
      %p117 = por %p115, %p116
      %p118 = scmp.ne.s32.totalorder %s110, %s112
      %p119 = scmp.eq.s32.totalorder %s25, 1
      %p120 = por %p118, %p119
      %p121 = scmp.ne.s32.totalorder %s112, %s113
      %p122 = scmp.eq.s32.totalorder %s25, 0
      %p123 = por %p121, %p122
      %p124 = scmp.ne.s32.totalorder %s112, %s113
      %p125 = scmp.eq.s32.totalorder %s26, 1
      %p126 = por %p124, %p125
      %p128 = scmp.ne.s32.totalorder %s113, %s127
      %p129 = scmp.eq.s32.totalorder %s26, 0
      %p130 = por %p128, %p129
      %s132 = sadd.s32 %s131, 1
      %p135 = scmp.eq.s32.totalorder %s20, 1
      %p136 = scmp.ne.s32.totalorder %s131, %s133
      %p137 = scmp.eq.s32.totalorder %s20, 0
      %p138 = por %p136, %p137
      %p139 = scmp.ne.s32.totalorder %s131, %s133
      %p140 = scmp.eq.s32.totalorder %s25, 1
      %p141 = por %p139, %p140
      %p142 = scmp.ne.s32.totalorder %s133, %s134
      %p143 = scmp.eq.s32.totalorder %s25, 0
      %p144 = por %p142, %p143
      %p145 = scmp.ne.s32.totalorder %s133, %s134
      %p146 = scmp.eq.s32.totalorder %s26, 1
      %p147 = por %p145, %p146
      %p149 = scmp.ne.s32.totalorder %s134, %s148
      %p150 = scmp.eq.s32.totalorder %s26, 0
      %p151 = por %p149, %p150
      %s153 = sadd.s32 %s152, 1
      %p156 = scmp.eq.s32.totalorder %s20, 1
      %p157 = scmp.ne.s32.totalorder %s152, %s154
      %p158 = scmp.eq.s32.totalorder %s20, 0
      %p159 = por %p157, %p158
      %p160 = scmp.ne.s32.totalorder %s152, %s154
      %p161 = scmp.eq.s32.totalorder %s25, 1
      %p162 = por %p160, %p161
      %p163 = scmp.ne.s32.totalorder %s154, %s155
      %p164 = scmp.eq.s32.totalorder %s25, 0
      %p165 = por %p163, %p164
      %p166 = scmp.ne.s32.totalorder %s154, %s155
      %p167 = scmp.eq.s32.totalorder %s26, 1
      %p168 = por %p166, %p167
      %p170 = scmp.ne.s32.totalorder %s155, %s169
      %p171 = scmp.eq.s32.totalorder %s26, 0
      %p172 = por %p170, %p171
      %s173 = ssub.s32 %s27, %s39
      %s174 = ssub.s32 %s28, %s35
      %s175 = sor.u32 %s173, %s174
      %p176 = scmp.eq.s32.totalorder %s175, 0
      %s178 = sadd.s32 %s177, 1
      %s179 = scalar_select %p176, %s177, %s178
      %p182 = pneg %p176
      %p183 = scmp.eq.s32.totalorder %s20, 1
      %p184 = por %p182, %p183
      %p185 = scmp.ne.s32.totalorder %s177, %s180
      %p186 = scmp.eq.s32.totalorder %s20, 0
      %p187 = por %p185, %p186
      %p188 = scmp.ne.s32.totalorder %s177, %s180
      %p189 = scmp.eq.s32.totalorder %s25, 1
      %p190 = por %p188, %p189
      %p191 = scmp.ne.s32.totalorder %s180, %s181
      %p192 = scmp.eq.s32.totalorder %s25, 0
      %p193 = por %p191, %p192
      %p194 = scmp.ne.s32.totalorder %s180, %s181
      %p195 = scmp.eq.s32.totalorder %s26, 1
      %p196 = por %p194, %p195
      %p198 = scmp.ne.s32.totalorder %s181, %s197
      %p199 = scmp.eq.s32.totalorder %s26, 0
      %p200 = por %p198, %p199
      %p201 = scmp.le.s32.totalorder 1, %s20
      %p202 = scmp.lt.s32.totalorder %s20, 3
      %p203 = pnand %p201, %p202
      %p204 = pneg %p203
      // Predicated region
      $region9: #{tpu_custom_call.1} parent=5 // pred_check
        _
      $region10: #{tpu_custom_call.1} parent=5 // pred_check_branch
        %206 = sbr.rel (%p203) target = $region12
      $region11: #{tpu_custom_call.1} parent=5 // pred_region
        %s207 = ssub.s32 %s20, 1
        // Predicated region
        $region13: #{tpu_custom_call.1} parent=11 // pred_check
          %p208 = pneg %p53
        $region14: #{tpu_custom_call.1} parent=11 // pred_check_branch
          %210 = sbr.rel (%p208) target = $region16
        $region15: #{tpu_custom_call.1} parent=11 // pred_region
          %s212 = ssub.s32 16, 16
          %213 = vsyncadd [#allocation5], %s212
          %216 = dma.hbm_to_smem %s0, 16, [#allocation2], [#allocation5]
        $region16: #{tpu_custom_call.1} parent=11 // pred_fallthru
          _
        // Predicated region
        $region17: #{tpu_custom_call.1} parent=11 // pred_check
          %p217 = pneg %p102
        $region18: #{tpu_custom_call.1} parent=11 // pred_check_branch
          %219 = sbr.rel (%p217) target = $region20
        $region19: #{tpu_custom_call.1} parent=11 // pred_region
          %s221 = ssub.s32 1024, 1024
          %222 = vsyncadd [#allocation8], %s221
          %s223 = sshll.u32 [#allocation7], 4
          %s224 = int_to_ptr.vmem [resolvable:$true] %s223
          %229 = dma.hbm_to_vmem [thread:$0]  %s2, 1024, %s224, [#allocation8], 64, 64, 4
        $region20: #{tpu_custom_call.1} parent=11 // pred_fallthru
          _
        // Predicated region
        $region21: #{tpu_custom_call.1} parent=11 // pred_check
          %p230 = pneg %p123
        $region22: #{tpu_custom_call.1} parent=11 // pred_check_branch
          %232 = sbr.rel (%p230) target = $region24
        $region23: #{tpu_custom_call.1} parent=11 // pred_region
          %s234 = ssub.s32 1024, 1024
          %235 = vsyncadd [#allocation8], %s234
          %s236 = sshll.u32 [#allocation9], 4
          %s237 = int_to_ptr.vmem [resolvable:$true] %s236
          %242 = dma.hbm_to_vmem [thread:$0]  %s3, 1024, %s237, [#allocation8], 64, 64, 4
        $region24: #{tpu_custom_call.1} parent=11 // pred_fallthru
          _
        // Predicated region
        $region25: #{tpu_custom_call.1} parent=11 // pred_check
          %p243 = pneg %p144
        $region26: #{tpu_custom_call.1} parent=11 // pred_check_branch
          %245 = sbr.rel (%p243) target = $region28
        $region27: #{tpu_custom_call.1} parent=11 // pred_region
          _
        $region28: #{tpu_custom_call.1} parent=11 // pred_fallthru
          _
        // Predicated region
        $region29: #{tpu_custom_call.1} parent=11 // pred_check
          %p246 = pneg %p165
        $region30: #{tpu_custom_call.1} parent=11 // pred_check_branch
          %248 = sbr.rel (%p246) target = $region32
        $region31: #{tpu_custom_call.1} parent=11 // pred_region
          _
        $region32: #{tpu_custom_call.1} parent=11 // pred_fallthru
          _
      $region12: #{tpu_custom_call.1} parent=5 // pred_fallthru
        _
      %p249 = scmp.lt.s32.totalorder %s20, 2
      // Predicated region
      $region33: #{tpu_custom_call.1} parent=5 // pred_check
        %p250 = pneg %p249
      $region34: #{tpu_custom_call.1} parent=5 // pred_check_branch
        %252 = sbr.rel (%p250) target = $region36
      $region35: #{tpu_custom_call.1} parent=5 // pred_region
        // Predicated region
        $region37: #{tpu_custom_call.1} parent=35 // pred_check
          %p253 = pneg %p75
        $region38: #{tpu_custom_call.1} parent=35 // pred_check_branch
          %255 = sbr.rel (%p253) target = $region40
        $region39: #{tpu_custom_call.1} parent=35 // pred_region
          %s256 = sand.u32 %s65, 1
          %s257 = scalar_lea.sflag [#allocation3], %s256
          %s258 = sand.u32 %s65, 1
          %s259 = smul.addr %s258, 128
          %s260 = scalar_lea.vmem [#allocation6], %s259
          %s261 = smul.u32 32, %s28
          %s263 = ssub.s32 2048, 2048
          %264 = vsyncadd %s257, %s263
          %s265 = smul.addr %s27, 32
          %s266 = sadd.s32 %s261, %s265
          %s267 = smul.addr %s266, 64
          %s268 = scalar_lea.hbm %s1, %s267
          %s269 = sshll.u32 %s260, 4
          %s270 = int_to_ptr.vmem [resolvable:$true] %s269
          %275 = dma.hbm_to_vmem [thread:$0]  %s268, 2048, %s270, %s257, 64, 64, 4
        $region40: #{tpu_custom_call.1} parent=35 // pred_fallthru
          _
      $region36: #{tpu_custom_call.1} parent=5 // pred_fallthru
        _
      %p276 = scmp.le.s32.totalorder 1, %s20
      %p277 = scmp.lt.s32.totalorder %s20, 3
      %p278 = pnand %p276, %p277
      %p279 = pneg %p278
      // Predicated region
      $region41: #{tpu_custom_call.1} parent=5 // pred_check
        _
      $region42: #{tpu_custom_call.1} parent=5 // pred_check_branch
        %281 = sbr.rel (%p278) target = $region44
      $region43: #{tpu_custom_call.1} parent=5 // pred_region
        %s282 = ssub.s32 %s20, 1
        // Predicated region
        $region45: #{tpu_custom_call.1} parent=43 // pred_check
          %p283 = pneg %p53
        $region46: #{tpu_custom_call.1} parent=43 // pred_check_branch
          %285 = sbr.rel (%p283) target = $region48
        $region47: #{tpu_custom_call.1} parent=43 // pred_region
          %286 = dma.done [#allocation5], 16
        $region48: #{tpu_custom_call.1} parent=43 // pred_fallthru
          _
        %s287 = sand.u32 %s68, 1
        %s288 = scalar_lea.sflag [#allocation3], %s287
        %s289 = sand.u32 %s68, 1
        %s290 = smul.addr %s289, 128
        %s291 = scalar_lea.vmem [#allocation6], %s290
        // Predicated region
        $region49: #{tpu_custom_call.1} parent=43 // pred_check
          %p292 = pneg %p81
        $region50: #{tpu_custom_call.1} parent=43 // pred_check_branch
          %294 = sbr.rel (%p292) target = $region52
        $region51: #{tpu_custom_call.1} parent=43 // pred_region
          %295 = dma.done %s288, 2048
        $region52: #{tpu_custom_call.1} parent=43 // pred_fallthru
          _
        // Predicated region
        $region53: #{tpu_custom_call.1} parent=43 // pred_check
          %p296 = pneg %p102
        $region54: #{tpu_custom_call.1} parent=43 // pred_check_branch
          %298 = sbr.rel (%p296) target = $region56
        $region55: #{tpu_custom_call.1} parent=43 // pred_region
          %299 = dma.done [#allocation8], 1024
        $region56: #{tpu_custom_call.1} parent=43 // pred_fallthru
          _
        // Predicated region
        $region57: #{tpu_custom_call.1} parent=43 // pred_check
          %p300 = pneg %p123
        $region58: #{tpu_custom_call.1} parent=43 // pred_check_branch
          %302 = sbr.rel (%p300) target = $region60
        $region59: #{tpu_custom_call.1} parent=43 // pred_region
          %303 = dma.done [#allocation8], 1024
        $region60: #{tpu_custom_call.1} parent=43 // pred_fallthru
          _
        %304 = sfence
        %p305 = pneg %p53
        %p306 = pneg %p50
        %s307 = sand.u32 %s68, 1
        %s308 = scalar_lea.sflag [#allocation3], %s307
        %s309 = sand.u32 %s68, 1
        %s310 = smul.addr %s309, 128
        %s311 = scalar_lea.vmem [#allocation6], %s310
        %p312 = pneg %p81
        %p313 = pneg %p78
        %p314 = pneg %p102
        %p315 = pneg %p99
        %p316 = pneg %p123
        %p317 = pneg %p120
        %p318 = pneg %p144
        %p319 = pneg %p141
        %p320 = pneg %p165
        %p321 = pneg %p162
        %p322 = pneg %p193
        %p323 = pneg %p190
        %s324 = sand.u32 %s180, 1
        %s325 = scalar_lea.sflag [#allocation4], %s324
        %s326 = sand.u32 %s180, 1
        %s327 = smul.addr %s326, 128
        %s328 = scalar_lea.vmem [#allocation10], %s327
        %s329 = smul.u32 32, %s30
        %s330 = smul.u32 32, %s30
        %s332 = sld [smem:[#allocation2 + %s29]]
        %v333 = vld [vmem:[%s4] sm:$0x1]
        %v334 = vstv %s332
        %v335 = vmul.f32 %v333, %v334
        %v336 = vld [vmem:[%s5] sm:$0x1]
        %v337 = vmul.f32 %v336, %v334
        %v338 = vld [vmem:[%s291] sm:$0xf]
        %v339 = vld [vmem:[%s291 + $0x4] sm:$0xf]
        %v340 = vld [vmem:[%s291 + $0x8] sm:$0xf]
        %v341 = vld [vmem:[%s291 + $0xc] sm:$0xf]
        %v342 = vld [vmem:[%s291 + $0x10] sm:$0xf]
        %v343 = vld [vmem:[%s291 + $0x14] sm:$0xf]
        %v344 = vld [vmem:[%s291 + $0x18] sm:$0xf]
        %v345 = vld [vmem:[%s291 + $0x1c] sm:$0xf]
        %v346 = vld [vmem:[%s291 + $0x20] sm:$0xf]
        %v347 = vld [vmem:[%s291 + $0x24] sm:$0xf]
        %v348 = vld [vmem:[%s291 + $0x28] sm:$0xf]
        %v349 = vld [vmem:[%s291 + $0x2c] sm:$0xf]
        %v350 = vld [vmem:[%s291 + $0x30] sm:$0xf]
        %v351 = vld [vmem:[%s291 + $0x34] sm:$0xf]
        %v352 = vld [vmem:[%s291 + $0x38] sm:$0xf]
        %v353 = vld [vmem:[%s291 + $0x3c] sm:$0xf]
        %v354 = vld [vmem:[#allocation7] sm:$0xf]
        %v355 = vld [vmem:[#allocation7 + $0x4] sm:$0xf]
        %v356 = vld [vmem:[#allocation7 + $0x8] sm:$0xf]
        %v357 = vld [vmem:[#allocation7 + $0xc] sm:$0xf]
        %v358 = vld [vmem:[#allocation7 + $0x10] sm:$0xf]
        %v359 = vld [vmem:[#allocation7 + $0x14] sm:$0xf]
        %v360 = vld [vmem:[#allocation7 + $0x18] sm:$0xf]
        %v361 = vld [vmem:[#allocation7 + $0x1c] sm:$0xf]
        %v362 = vld [vmem:[#allocation7 + $0x20] sm:$0xf]
        %v363 = vld [vmem:[#allocation7 + $0x24] sm:$0xf]
        %v364 = vld [vmem:[#allocation7 + $0x28] sm:$0xf]
        %v365 = vld [vmem:[#allocation7 + $0x2c] sm:$0xf]
        %v366 = vld [vmem:[#allocation7 + $0x30] sm:$0xf]
        %v367 = vld [vmem:[#allocation7 + $0x34] sm:$0xf]
        %v368 = vld [vmem:[#allocation7 + $0x38] sm:$0xf]
        %v369 = vld [vmem:[#allocation7 + $0x3c] sm:$0xf]
        %v386 = vunpack.c.l.b16 %v338
        %v387 = vunpack.c.l.b16 %v339
        %v388 = vunpack.c.l.b16 %v340
        %v389 = vunpack.c.l.b16 %v341
        %v390 = vunpack.c.l.b16 %v342
        %v391 = vunpack.c.l.b16 %v343
        %v392 = vunpack.c.l.b16 %v344
        %v393 = vunpack.c.l.b16 %v345
        %v394 = vunpack.c.l.b16 %v346
        %v395 = vunpack.c.l.b16 %v347
        %v396 = vunpack.c.l.b16 %v348
        %v397 = vunpack.c.l.b16 %v349
        %v398 = vunpack.c.l.b16 %v350
        %v399 = vunpack.c.l.b16 %v351
        %v400 = vunpack.c.l.b16 %v352
        %v401 = vunpack.c.l.b16 %v353
        %v402 = vpack.c.b16 %v387, %v386
        %v403 = vpack.c.b16 %v389, %v388
        %v404 = vpack.c.b16 %v391, %v390
        %v405 = vpack.c.b16 %v393, %v392
        %v406 = vpack.c.b16 %v395, %v394
        %v407 = vpack.c.b16 %v397, %v396
        %v408 = vpack.c.b16 %v399, %v398
        %v409 = vpack.c.b16 %v401, %v400
        %v434 = vunpack.c.l.b16 %v354
        %v435 = vunpack.c.l.b16 %v355
        %v436 = vunpack.c.l.b16 %v356
        %v437 = vunpack.c.l.b16 %v357
        %v438 = vunpack.c.l.b16 %v358
        %v439 = vunpack.c.l.b16 %v359
        %v440 = vunpack.c.l.b16 %v360
        %v441 = vunpack.c.l.b16 %v361
        %v442 = vunpack.c.l.b16 %v362
        %v443 = vunpack.c.l.b16 %v363
        %v444 = vunpack.c.l.b16 %v364
        %v445 = vunpack.c.l.b16 %v365
        %v446 = vunpack.c.l.b16 %v366
        %v447 = vunpack.c.l.b16 %v367
        %v448 = vunpack.c.l.b16 %v368
        %v449 = vunpack.c.l.b16 %v369
        %v450 = vpack.c.b16 %v435, %v434
        %v451 = vpack.c.b16 %v437, %v436
        %v452 = vpack.c.b16 %v439, %v438
        %v453 = vpack.c.b16 %v441, %v440
        %v454 = vpack.c.b16 %v443, %v442
        %v455 = vpack.c.b16 %v445, %v444
        %v456 = vpack.c.b16 %v447, %v446
        %v457 = vpack.c.b16 %v449, %v448
        %466 = vmatprep.subr.bf16.mxu0 0
        %467 = vmatpush1.bf16.msra.mxu0 %v457
        %468 = vmatprep.subr.bf16.mxu0 0
        %469 = vmatpush1.bf16.msra.mxu0 %v456
        %470 = vmatprep.subr.bf16.mxu0 0
        %471 = vmatpush1.bf16.msra.mxu0 %v455
        %472 = vmatprep.subr.bf16.mxu0 0
        %473 = vmatpush1.bf16.msra.mxu0 %v454
        %474 = vmatprep.subr.bf16.mxu0 0
        %475 = vmatpush1.bf16.msra.mxu0 %v453
        %476 = vmatprep.subr.bf16.mxu0 0
        %477 = vmatpush1.bf16.msra.mxu0 %v452
        %478 = vmatprep.subr.bf16.mxu0 0
        %479 = vmatpush1.bf16.msra.mxu0 %v451
        %480 = vmatprep.subr.bf16.mxu0 0
        %481 = vmatpush1.bf16.msra.mxu0 %v450
        %482 = vmatprep.subr.bf16.mxu0 0
        %483 = vmatpush2.bf16.msra.mxu0 0
        %484 = vmatprep.subr.bf16.mxu0 0
        %485 = vmatpush2.bf16.msra.mxu0 0
        %486 = vmatprep.subr.bf16.mxu0 0
        %487 = vmatpush2.bf16.msra.mxu0 0
        %488 = vmatprep.subr.bf16.mxu0 0
        %489 = vmatpush2.bf16.msra.mxu0 0
        %490 = vmatprep.subr.bf16.mxu0 0
        %491 = vmatpush2.bf16.msra.mxu0 0
        %492 = vmatprep.subr.bf16.mxu0 0
        %493 = vmatpush2.bf16.msra.mxu0 0
        %494 = vmatprep.subr.bf16.mxu0 0
        %495 = vmatpush2.bf16.msra.mxu0 0
        %496 = vmatprep.subr.bf16.mxu0 0
        %497 = vmatpush2.bf16.msra.mxu0 0
        %498 = vmatprep.mubr.bf16.mxu0 0
        %499 = vmatmul.mubr.bf16.gmra.mxu0 %v402
        %v500 = vpop.f32.mrf.mxu0
        %v501 = vadd.f32 0.0, %v500
        %v502 = vpop.f32.mrf.mxu0
        %v503 = vpop.f32.mrf.mxu0
        %v504 = vadd.f32 0.0, %v503
        %v505 = vpop.f32.mrf.mxu0
        %506 = vmatprep.mubr.bf16.mxu0 0
        %507 = vmatmul.mubr.bf16.gmra.mxu0 %v403
        %v508 = vpop.f32.mrf.mxu0
        %v509 = vadd.f32 0.0, %v508
        %v510 = vpop.f32.mrf.mxu0
        %v511 = vpop.f32.mrf.mxu0
        %v512 = vadd.f32 0.0, %v511
        %v513 = vpop.f32.mrf.mxu0
        %514 = vmatprep.mubr.bf16.mxu0 0
        %515 = vmatmul.mubr.bf16.gmra.mxu0 %v404
        %v516 = vpop.f32.mrf.mxu0
        %v517 = vadd.f32 0.0, %v516
        %v518 = vpop.f32.mrf.mxu0
        %v519 = vpop.f32.mrf.mxu0
        %v520 = vadd.f32 0.0, %v519
        %v521 = vpop.f32.mrf.mxu0
        %522 = vmatprep.mubr.bf16.mxu0 0
        %523 = vmatmul.mubr.bf16.gmra.mxu0 %v405
        %v524 = vpop.f32.mrf.mxu0
        %v525 = vadd.f32 0.0, %v524
        %v526 = vpop.f32.mrf.mxu0
        %v527 = vpop.f32.mrf.mxu0
        %v528 = vadd.f32 0.0, %v527
        %v529 = vpop.f32.mrf.mxu0
        %530 = vmatprep.mubr.bf16.mxu0 0
        %531 = vmatmul.mubr.bf16.gmra.mxu0 %v406
        %v532 = vpop.f32.mrf.mxu0
        %v533 = vadd.f32 0.0, %v532
        %v534 = vpop.f32.mrf.mxu0
        %v535 = vpop.f32.mrf.mxu0
        %v536 = vadd.f32 0.0, %v535
        %v537 = vpop.f32.mrf.mxu0
        %538 = vmatprep.mubr.bf16.mxu0 0
        %539 = vmatmul.mubr.bf16.gmra.mxu0 %v407
        %v540 = vpop.f32.mrf.mxu0
        %v541 = vadd.f32 0.0, %v540
        %v542 = vpop.f32.mrf.mxu0
        %v543 = vpop.f32.mrf.mxu0
        %v544 = vadd.f32 0.0, %v543
        %v545 = vpop.f32.mrf.mxu0
        %546 = vmatprep.mubr.bf16.mxu0 0
        %547 = vmatmul.mubr.bf16.gmra.mxu0 %v408
        %v548 = vpop.f32.mrf.mxu0
        %v549 = vadd.f32 0.0, %v548
        %v550 = vpop.f32.mrf.mxu0
        %v551 = vpop.f32.mrf.mxu0
        %v552 = vadd.f32 0.0, %v551
        %v553 = vpop.f32.mrf.mxu0
        %554 = vmatprep.mubr.bf16.mxu0 0
        %555 = vmatmul.mubr.bf16.gmra.mxu0 %v409
        %v556 = vpop.f32.mrf.mxu0
        %v557 = vadd.f32 0.0, %v556
        %v558 = vpop.f32.mrf.mxu0
        %v559 = vpop.f32.mrf.mxu0
        %v560 = vadd.f32 0.0, %v559
        %v561 = vpop.f32.mrf.mxu0
        %562 = vdwg.mxu0
        %v563 = vld [vmem:[#allocation9] sm:$0xf]
        %v564 = vld [vmem:[#allocation9 + $0x4] sm:$0xf]
        %v565 = vld [vmem:[#allocation9 + $0x8] sm:$0xf]
        %v566 = vld [vmem:[#allocation9 + $0xc] sm:$0xf]
        %v567 = vld [vmem:[#allocation9 + $0x10] sm:$0xf]
        %v568 = vld [vmem:[#allocation9 + $0x14] sm:$0xf]
        %v569 = vld [vmem:[#allocation9 + $0x18] sm:$0xf]
        %v570 = vld [vmem:[#allocation9 + $0x1c] sm:$0xf]
        %v571 = vld [vmem:[#allocation9 + $0x20] sm:$0xf]
        %v572 = vld [vmem:[#allocation9 + $0x24] sm:$0xf]
        %v573 = vld [vmem:[#allocation9 + $0x28] sm:$0xf]
        %v574 = vld [vmem:[#allocation9 + $0x2c] sm:$0xf]
        %v575 = vld [vmem:[#allocation9 + $0x30] sm:$0xf]
        %v576 = vld [vmem:[#allocation9 + $0x34] sm:$0xf]
        %v577 = vld [vmem:[#allocation9 + $0x38] sm:$0xf]
        %v578 = vld [vmem:[#allocation9 + $0x3c] sm:$0xf]
        %v595 = vunpack.c.l.b16 %v563
        %v596 = vunpack.c.l.b16 %v564
        %v597 = vunpack.c.l.b16 %v565
        %v598 = vunpack.c.l.b16 %v566
        %v599 = vunpack.c.l.b16 %v567
        %v600 = vunpack.c.l.b16 %v568
        %v601 = vunpack.c.l.b16 %v569
        %v602 = vunpack.c.l.b16 %v570
        %v603 = vunpack.c.l.b16 %v571
        %v604 = vunpack.c.l.b16 %v572
        %v605 = vunpack.c.l.b16 %v573
        %v606 = vunpack.c.l.b16 %v574
        %v607 = vunpack.c.l.b16 %v575
        %v608 = vunpack.c.l.b16 %v576
        %v609 = vunpack.c.l.b16 %v577
        %v610 = vunpack.c.l.b16 %v578
        %v611 = vpack.c.b16 %v596, %v595
        %v612 = vpack.c.b16 %v598, %v597
        %v613 = vpack.c.b16 %v600, %v599
        %v614 = vpack.c.b16 %v602, %v601
        %v615 = vpack.c.b16 %v604, %v603
        %v616 = vpack.c.b16 %v606, %v605
        %v617 = vpack.c.b16 %v608, %v607
        %v618 = vpack.c.b16 %v610, %v609
        %627 = vmatprep.subr.bf16.mxu0 0
        %628 = vmatpush1.bf16.msra.mxu0 %v618
        %629 = vmatprep.subr.bf16.mxu0 0
        %630 = vmatpush1.bf16.msra.mxu0 %v617
        %631 = vmatprep.subr.bf16.mxu0 0
        %632 = vmatpush1.bf16.msra.mxu0 %v616
        %633 = vmatprep.subr.bf16.mxu0 0
        %634 = vmatpush1.bf16.msra.mxu0 %v615
        %635 = vmatprep.subr.bf16.mxu0 0
        %636 = vmatpush1.bf16.msra.mxu0 %v614
        %637 = vmatprep.subr.bf16.mxu0 0
        %638 = vmatpush1.bf16.msra.mxu0 %v613
        %639 = vmatprep.subr.bf16.mxu0 0
        %640 = vmatpush1.bf16.msra.mxu0 %v612
        %641 = vmatprep.subr.bf16.mxu0 0
        %642 = vmatpush1.bf16.msra.mxu0 %v611
        %643 = vmatprep.subr.bf16.mxu0 0
        %644 = vmatpush2.bf16.msra.mxu0 0
        %645 = vmatprep.subr.bf16.mxu0 0
        %646 = vmatpush2.bf16.msra.mxu0 0
        %647 = vmatprep.subr.bf16.mxu0 0
        %648 = vmatpush2.bf16.msra.mxu0 0
        %649 = vmatprep.subr.bf16.mxu0 0
        %650 = vmatpush2.bf16.msra.mxu0 0
        %651 = vmatprep.subr.bf16.mxu0 0
        %652 = vmatpush2.bf16.msra.mxu0 0
        %653 = vmatprep.subr.bf16.mxu0 0
        %654 = vmatpush2.bf16.msra.mxu0 0
        %655 = vmatprep.subr.bf16.mxu0 0
        %656 = vmatpush2.bf16.msra.mxu0 0
        %657 = vmatprep.subr.bf16.mxu0 0
        %658 = vmatpush2.bf16.msra.mxu0 0
        %659 = vmatprep.mubr.bf16.mxu0 0
        %660 = vmatmul.mubr.bf16.gmra.mxu0 %v402
        %v661 = vpop.f32.mrf.mxu0
        %v662 = vadd.f32 0.0, %v661
        %v663 = vpop.f32.mrf.mxu0
        %v664 = vpop.f32.mrf.mxu0
        %v665 = vadd.f32 0.0, %v664
        %v666 = vpop.f32.mrf.mxu0
        %667 = vmatprep.mubr.bf16.mxu0 0
        %668 = vmatmul.mubr.bf16.gmra.mxu0 %v403
        %v669 = vpop.f32.mrf.mxu0
        %v670 = vadd.f32 0.0, %v669
        %v671 = vpop.f32.mrf.mxu0
        %v672 = vpop.f32.mrf.mxu0
        %v673 = vadd.f32 0.0, %v672
        %v674 = vpop.f32.mrf.mxu0
        %675 = vmatprep.mubr.bf16.mxu0 0
        %676 = vmatmul.mubr.bf16.gmra.mxu0 %v404
        %v677 = vpop.f32.mrf.mxu0
        %v678 = vadd.f32 0.0, %v677
        %v679 = vpop.f32.mrf.mxu0
        %v680 = vpop.f32.mrf.mxu0
        %v681 = vadd.f32 0.0, %v680
        %v682 = vpop.f32.mrf.mxu0
        %683 = vmatprep.mubr.bf16.mxu0 0
        %684 = vmatmul.mubr.bf16.gmra.mxu0 %v405
        %v685 = vpop.f32.mrf.mxu0
        %v686 = vadd.f32 0.0, %v685
        %v687 = vpop.f32.mrf.mxu0
        %v688 = vpop.f32.mrf.mxu0
        %v689 = vadd.f32 0.0, %v688
        %v690 = vpop.f32.mrf.mxu0
        %691 = vmatprep.mubr.bf16.mxu0 0
        %692 = vmatmul.mubr.bf16.gmra.mxu0 %v406
        %v693 = vpop.f32.mrf.mxu0
        %v694 = vadd.f32 0.0, %v693
        %v695 = vpop.f32.mrf.mxu0
        %v696 = vpop.f32.mrf.mxu0
        %v697 = vadd.f32 0.0, %v696
        %v698 = vpop.f32.mrf.mxu0
        %699 = vmatprep.mubr.bf16.mxu0 0
        %700 = vmatmul.mubr.bf16.gmra.mxu0 %v407
        %v701 = vpop.f32.mrf.mxu0
        %v702 = vadd.f32 0.0, %v701
        %v703 = vpop.f32.mrf.mxu0
        %v704 = vpop.f32.mrf.mxu0
        %v705 = vadd.f32 0.0, %v704
        %v706 = vpop.f32.mrf.mxu0
        %707 = vmatprep.mubr.bf16.mxu0 0
        %708 = vmatmul.mubr.bf16.gmra.mxu0 %v408
        %v709 = vpop.f32.mrf.mxu0
        %v710 = vadd.f32 0.0, %v709
        %v711 = vpop.f32.mrf.mxu0
        %v712 = vpop.f32.mrf.mxu0
        %v713 = vadd.f32 0.0, %v712
        %v714 = vpop.f32.mrf.mxu0
        %715 = vmatprep.mubr.bf16.mxu0 0
        %716 = vmatmul.mubr.bf16.gmra.mxu0 %v409
        %v717 = vpop.f32.mrf.mxu0
        %v718 = vadd.f32 0.0, %v717
        %v719 = vpop.f32.mrf.mxu0
        %v720 = vpop.f32.mrf.mxu0
        %v721 = vadd.f32 0.0, %v720
        %v722 = vpop.f32.mrf.mxu0
        %723 = vdwg.mxu0
        %v725 = vlaneseq
        %v726 = vshrl.u32 %v725, 7
        %v727 = vsub.s32 0, %v726
        %v728 = vrot.slane %v335, %v727
        %v730 = vmul.f32 %v501, %v728
        %v731 = vmul.f32 %v504, %v728
        %v732 = vmul.f32 %v509, %v728
        %v733 = vmul.f32 %v512, %v728
        %v734 = vmul.f32 %v517, %v728
        %v735 = vmul.f32 %v520, %v728
        %v736 = vmul.f32 %v525, %v728
        %v737 = vmul.f32 %v528, %v728
        %v738 = vmul.f32 %v533, %v728
        %v739 = vmul.f32 %v536, %v728
        %v740 = vmul.f32 %v541, %v728
        %v741 = vmul.f32 %v544, %v728
        %v742 = vmul.f32 %v549, %v728
        %v743 = vmul.f32 %v552, %v728
        %v744 = vmul.f32 %v557, %v728
        %v745 = vmul.f32 %v560, %v728
        %v747 = vlaneseq
        %v748 = vshrl.u32 %v747, 7
        %v749 = vsub.s32 0, %v748
        %v750 = vrot.slane %v337, %v749
        %v752 = vadd.f32 %v730, %v750
        %v753 = vadd.f32 %v731, %v750
        %v754 = vadd.f32 %v732, %v750
        %v755 = vadd.f32 %v733, %v750
        %v756 = vadd.f32 %v734, %v750
        %v757 = vadd.f32 %v735, %v750
        %v758 = vadd.f32 %v736, %v750
        %v759 = vadd.f32 %v737, %v750
        %v760 = vadd.f32 %v738, %v750
        %v761 = vadd.f32 %v739, %v750
        %v762 = vadd.f32 %v740, %v750
        %v763 = vadd.f32 %v741, %v750
        %v764 = vadd.f32 %v742, %v750
        %v765 = vadd.f32 %v743, %v750
        %v766 = vadd.f32 %v744, %v750
        %v767 = vadd.f32 %v745, %v750
        %v768 = vadd.f32 %v752, %v662
        %v769 = vadd.f32 %v753, %v665
        %v770 = vadd.f32 %v754, %v670
        %v771 = vadd.f32 %v755, %v673
        %v772 = vadd.f32 %v756, %v678
        %v773 = vadd.f32 %v757, %v681
        %v774 = vadd.f32 %v758, %v686
        %v775 = vadd.f32 %v759, %v689
        %v776 = vadd.f32 %v760, %v694
        %v777 = vadd.f32 %v761, %v697
        %v778 = vadd.f32 %v762, %v702
        %v779 = vadd.f32 %v763, %v705
        %v780 = vadd.f32 %v764, %v710
        %v781 = vadd.f32 %v765, %v713
        %v782 = vadd.f32 %v766, %v718
        %v783 = vadd.f32 %v767, %v721
        %v784 = vpack.c.bf16 %v769, %v768
        %v785 = vpack.c.bf16 %v771, %v770
        %v786 = vpack.c.bf16 %v773, %v772
        %v787 = vpack.c.bf16 %v775, %v774
        %v788 = vpack.c.bf16 %v777, %v776
        %v789 = vpack.c.bf16 %v779, %v778
        %v790 = vpack.c.bf16 %v781, %v780
        %v791 = vpack.c.bf16 %v783, %v782
        %v800 = vunpack.c.l.b16 %v784
        %v801 = vunpack.c.h.b16 %v784
        %v802 = vunpack.c.l.b16 %v785
        %v803 = vunpack.c.h.b16 %v785
        %v804 = vunpack.c.l.b16 %v786
        %v805 = vunpack.c.h.b16 %v786
        %v806 = vunpack.c.l.b16 %v787
        %v807 = vunpack.c.h.b16 %v787
        %v808 = vunpack.c.l.b16 %v788
        %v809 = vunpack.c.h.b16 %v788
        %v810 = vunpack.c.l.b16 %v789
        %v811 = vunpack.c.h.b16 %v789
        %v812 = vunpack.c.l.b16 %v790
        %v813 = vunpack.c.h.b16 %v790
        %v814 = vunpack.c.l.b16 %v791
        %v815 = vunpack.c.h.b16 %v791
        %v816 = vpack.c.b16 %v800, %v800
        %v817 = vpack.c.b16 %v801, %v801
        %v818 = vpack.c.b16 %v802, %v802
        %v819 = vpack.c.b16 %v803, %v803
        %v820 = vpack.c.b16 %v804, %v804
        %v821 = vpack.c.b16 %v805, %v805
        %v822 = vpack.c.b16 %v806, %v806
        %v823 = vpack.c.b16 %v807, %v807
        %v824 = vpack.c.b16 %v808, %v808
        %v825 = vpack.c.b16 %v809, %v809
        %v826 = vpack.c.b16 %v810, %v810
        %v827 = vpack.c.b16 %v811, %v811
        %v828 = vpack.c.b16 %v812, %v812
        %v829 = vpack.c.b16 %v813, %v813
        %v830 = vpack.c.b16 %v814, %v814
        %v831 = vpack.c.b16 %v815, %v815
        %848 = vst [vmem:[%s328] sm:$0xf] %v816
        %849 = vst [vmem:[%s328 + $0x4] sm:$0xf] %v817
        %850 = vst [vmem:[%s328 + $0x8] sm:$0xf] %v818
        %851 = vst [vmem:[%s328 + $0xc] sm:$0xf] %v819
        %852 = vst [vmem:[%s328 + $0x10] sm:$0xf] %v820
        %853 = vst [vmem:[%s328 + $0x14] sm:$0xf] %v821
        %854 = vst [vmem:[%s328 + $0x18] sm:$0xf] %v822
        %855 = vst [vmem:[%s328 + $0x1c] sm:$0xf] %v823
        %856 = vst [vmem:[%s328 + $0x20] sm:$0xf] %v824
        %857 = vst [vmem:[%s328 + $0x24] sm:$0xf] %v825
        %858 = vst [vmem:[%s328 + $0x28] sm:$0xf] %v826
        %859 = vst [vmem:[%s328 + $0x2c] sm:$0xf] %v827
        %860 = vst [vmem:[%s328 + $0x30] sm:$0xf] %v828
        %861 = vst [vmem:[%s328 + $0x34] sm:$0xf] %v829
        %862 = vst [vmem:[%s328 + $0x38] sm:$0xf] %v830
        %863 = vst [vmem:[%s328 + $0x3c] sm:$0xf] %v831
        %s864 = scalar_lea.vmem %s291, 64 [#allocation6]
        %v865 = vld [vmem:[%s864] sm:$0xf]
        %v866 = vld [vmem:[%s864 + $0x4] sm:$0xf]
        %v867 = vld [vmem:[%s864 + $0x8] sm:$0xf]
        %v868 = vld [vmem:[%s864 + $0xc] sm:$0xf]
        %v869 = vld [vmem:[%s864 + $0x10] sm:$0xf]
        %v870 = vld [vmem:[%s864 + $0x14] sm:$0xf]
        %v871 = vld [vmem:[%s864 + $0x18] sm:$0xf]
        %v872 = vld [vmem:[%s864 + $0x1c] sm:$0xf]
        %v873 = vld [vmem:[%s864 + $0x20] sm:$0xf]
        %v874 = vld [vmem:[%s864 + $0x24] sm:$0xf]
        %v875 = vld [vmem:[%s864 + $0x28] sm:$0xf]
        %v876 = vld [vmem:[%s864 + $0x2c] sm:$0xf]
        %v877 = vld [vmem:[%s864 + $0x30] sm:$0xf]
        %v878 = vld [vmem:[%s864 + $0x34] sm:$0xf]
        %v879 = vld [vmem:[%s864 + $0x38] sm:$0xf]
        %v880 = vld [vmem:[%s864 + $0x3c] sm:$0xf]
        %v881 = vld [vmem:[#allocation7] sm:$0xf]
        %v882 = vld [vmem:[#allocation7 + $0x4] sm:$0xf]
        %v883 = vld [vmem:[#allocation7 + $0x8] sm:$0xf]
        %v884 = vld [vmem:[#allocation7 + $0xc] sm:$0xf]
        %v885 = vld [vmem:[#allocation7 + $0x10] sm:$0xf]
        %v886 = vld [vmem:[#allocation7 + $0x14] sm:$0xf]
        %v887 = vld [vmem:[#allocation7 + $0x18] sm:$0xf]
        %v888 = vld [vmem:[#allocation7 + $0x1c] sm:$0xf]
        %v889 = vld [vmem:[#allocation7 + $0x20] sm:$0xf]
        %v890 = vld [vmem:[#allocation7 + $0x24] sm:$0xf]
        %v891 = vld [vmem:[#allocation7 + $0x28] sm:$0xf]
        %v892 = vld [vmem:[#allocation7 + $0x2c] sm:$0xf]
        %v893 = vld [vmem:[#allocation7 + $0x30] sm:$0xf]
        %v894 = vld [vmem:[#allocation7 + $0x34] sm:$0xf]
        %v895 = vld [vmem:[#allocation7 + $0x38] sm:$0xf]
        %v896 = vld [vmem:[#allocation7 + $0x3c] sm:$0xf]
        %v913 = vunpack.c.l.b16 %v865
        %v914 = vunpack.c.l.b16 %v866
        %v915 = vunpack.c.l.b16 %v867
        %v916 = vunpack.c.l.b16 %v868
        %v917 = vunpack.c.l.b16 %v869
        %v918 = vunpack.c.l.b16 %v870
        %v919 = vunpack.c.l.b16 %v871
        %v920 = vunpack.c.l.b16 %v872
        %v921 = vunpack.c.l.b16 %v873
        %v922 = vunpack.c.l.b16 %v874
        %v923 = vunpack.c.l.b16 %v875
        %v924 = vunpack.c.l.b16 %v876
        %v925 = vunpack.c.l.b16 %v877
        %v926 = vunpack.c.l.b16 %v878
        %v927 = vunpack.c.l.b16 %v879
        %v928 = vunpack.c.l.b16 %v880
        %v929 = vpack.c.b16 %v914, %v913
        %v930 = vpack.c.b16 %v916, %v915
        %v931 = vpack.c.b16 %v918, %v917
        %v932 = vpack.c.b16 %v920, %v919
        %v933 = vpack.c.b16 %v922, %v921
        %v934 = vpack.c.b16 %v924, %v923
        %v935 = vpack.c.b16 %v926, %v925
        %v936 = vpack.c.b16 %v928, %v927
        %v961 = vunpack.c.l.b16 %v881
        %v962 = vunpack.c.l.b16 %v882
        %v963 = vunpack.c.l.b16 %v883
        %v964 = vunpack.c.l.b16 %v884
        %v965 = vunpack.c.l.b16 %v885
        %v966 = vunpack.c.l.b16 %v886
        %v967 = vunpack.c.l.b16 %v887
        %v968 = vunpack.c.l.b16 %v888
        %v969 = vunpack.c.l.b16 %v889
        %v970 = vunpack.c.l.b16 %v890
        %v971 = vunpack.c.l.b16 %v891
        %v972 = vunpack.c.l.b16 %v892
        %v973 = vunpack.c.l.b16 %v893
        %v974 = vunpack.c.l.b16 %v894
        %v975 = vunpack.c.l.b16 %v895
        %v976 = vunpack.c.l.b16 %v896
        %v977 = vpack.c.b16 %v962, %v961
        %v978 = vpack.c.b16 %v964, %v963
        %v979 = vpack.c.b16 %v966, %v965
        %v980 = vpack.c.b16 %v968, %v967
        %v981 = vpack.c.b16 %v970, %v969
        %v982 = vpack.c.b16 %v972, %v971
        %v983 = vpack.c.b16 %v974, %v973
        %v984 = vpack.c.b16 %v976, %v975
        %993 = vmatprep.subr.bf16.mxu0 0
        %994 = vmatpush1.bf16.msra.mxu0 %v984
        %995 = vmatprep.subr.bf16.mxu0 0
        %996 = vmatpush1.bf16.msra.mxu0 %v983
        %997 = vmatprep.subr.bf16.mxu0 0
        %998 = vmatpush1.bf16.msra.mxu0 %v982
        %999 = vmatprep.subr.bf16.mxu0 0
        %1000 = vmatpush1.bf16.msra.mxu0 %v981
        %1001 = vmatprep.subr.bf16.mxu0 0
        %1002 = vmatpush1.bf16.msra.mxu0 %v980
        %1003 = vmatprep.subr.bf16.mxu0 0
        %1004 = vmatpush1.bf16.msra.mxu0 %v979
        %1005 = vmatprep.subr.bf16.mxu0 0
        %1006 = vmatpush1.bf16.msra.mxu0 %v978
        %1007 = vmatprep.subr.bf16.mxu0 0
        %1008 = vmatpush1.bf16.msra.mxu0 %v977
        %1009 = vmatprep.subr.bf16.mxu0 0
        %1010 = vmatpush2.bf16.msra.mxu0 0
        %1011 = vmatprep.subr.bf16.mxu0 0
        %1012 = vmatpush2.bf16.msra.mxu0 0
        %1013 = vmatprep.subr.bf16.mxu0 0
        %1014 = vmatpush2.bf16.msra.mxu0 0
        %1015 = vmatprep.subr.bf16.mxu0 0
        %1016 = vmatpush2.bf16.msra.mxu0 0
        %1017 = vmatprep.subr.bf16.mxu0 0
        %1018 = vmatpush2.bf16.msra.mxu0 0
        %1019 = vmatprep.subr.bf16.mxu0 0
        %1020 = vmatpush2.bf16.msra.mxu0 0
        %1021 = vmatprep.subr.bf16.mxu0 0
        %1022 = vmatpush2.bf16.msra.mxu0 0
        %1023 = vmatprep.subr.bf16.mxu0 0
        %1024 = vmatpush2.bf16.msra.mxu0 0
        %1025 = vmatprep.mubr.bf16.mxu0 0
        %1026 = vmatmul.mubr.bf16.gmra.mxu0 %v929
        %v1027 = vpop.f32.mrf.mxu0
        %v1028 = vadd.f32 0.0, %v1027
        %v1029 = vpop.f32.mrf.mxu0
        %v1030 = vpop.f32.mrf.mxu0
        %v1031 = vadd.f32 0.0, %v1030
        %v1032 = vpop.f32.mrf.mxu0
        %1033 = vmatprep.mubr.bf16.mxu0 0
        %1034 = vmatmul.mubr.bf16.gmra.mxu0 %v930
        %v1035 = vpop.f32.mrf.mxu0
        %v1036 = vadd.f32 0.0, %v1035
        %v1037 = vpop.f32.mrf.mxu0
        %v1038 = vpop.f32.mrf.mxu0
        %v1039 = vadd.f32 0.0, %v1038
        %v1040 = vpop.f32.mrf.mxu0
        %1041 = vmatprep.mubr.bf16.mxu0 0
        %1042 = vmatmul.mubr.bf16.gmra.mxu0 %v931
        %v1043 = vpop.f32.mrf.mxu0
        %v1044 = vadd.f32 0.0, %v1043
        %v1045 = vpop.f32.mrf.mxu0
        %v1046 = vpop.f32.mrf.mxu0
        %v1047 = vadd.f32 0.0, %v1046
        %v1048 = vpop.f32.mrf.mxu0
        %1049 = vmatprep.mubr.bf16.mxu0 0
        %1050 = vmatmul.mubr.bf16.gmra.mxu0 %v932
        %v1051 = vpop.f32.mrf.mxu0
        %v1052 = vadd.f32 0.0, %v1051
        %v1053 = vpop.f32.mrf.mxu0
        %v1054 = vpop.f32.mrf.mxu0
        %v1055 = vadd.f32 0.0, %v1054
        %v1056 = vpop.f32.mrf.mxu0
        %1057 = vmatprep.mubr.bf16.mxu0 0
        %1058 = vmatmul.mubr.bf16.gmra.mxu0 %v933
        %v1059 = vpop.f32.mrf.mxu0
        %v1060 = vadd.f32 0.0, %v1059
        %v1061 = vpop.f32.mrf.mxu0
        %v1062 = vpop.f32.mrf.mxu0
        %v1063 = vadd.f32 0.0, %v1062
        %v1064 = vpop.f32.mrf.mxu0
        %1065 = vmatprep.mubr.bf16.mxu0 0
        %1066 = vmatmul.mubr.bf16.gmra.mxu0 %v934
        %v1067 = vpop.f32.mrf.mxu0
        %v1068 = vadd.f32 0.0, %v1067
        %v1069 = vpop.f32.mrf.mxu0
        %v1070 = vpop.f32.mrf.mxu0
        %v1071 = vadd.f32 0.0, %v1070
        %v1072 = vpop.f32.mrf.mxu0
        %1073 = vmatprep.mubr.bf16.mxu0 0
        %1074 = vmatmul.mubr.bf16.gmra.mxu0 %v935
        %v1075 = vpop.f32.mrf.mxu0
        %v1076 = vadd.f32 0.0, %v1075
        %v1077 = vpop.f32.mrf.mxu0
        %v1078 = vpop.f32.mrf.mxu0
        %v1079 = vadd.f32 0.0, %v1078
        %v1080 = vpop.f32.mrf.mxu0
        %1081 = vmatprep.mubr.bf16.mxu0 0
        %1082 = vmatmul.mubr.bf16.gmra.mxu0 %v936
        %v1083 = vpop.f32.mrf.mxu0
        %v1084 = vadd.f32 0.0, %v1083
        %v1085 = vpop.f32.mrf.mxu0
        %v1086 = vpop.f32.mrf.mxu0
        %v1087 = vadd.f32 0.0, %v1086
        %v1088 = vpop.f32.mrf.mxu0
        %1089 = vdwg.mxu0
        %v1090 = vld [vmem:[#allocation9] sm:$0xf]
        %v1091 = vld [vmem:[#allocation9 + $0x4] sm:$0xf]
        %v1092 = vld [vmem:[#allocation9 + $0x8] sm:$0xf]
        %v1093 = vld [vmem:[#allocation9 + $0xc] sm:$0xf]
        %v1094 = vld [vmem:[#allocation9 + $0x10] sm:$0xf]
        %v1095 = vld [vmem:[#allocation9 + $0x14] sm:$0xf]
        %v1096 = vld [vmem:[#allocation9 + $0x18] sm:$0xf]
        %v1097 = vld [vmem:[#allocation9 + $0x1c] sm:$0xf]
        %v1098 = vld [vmem:[#allocation9 + $0x20] sm:$0xf]
        %v1099 = vld [vmem:[#allocation9 + $0x24] sm:$0xf]
        %v1100 = vld [vmem:[#allocation9 + $0x28] sm:$0xf]
        %v1101 = vld [vmem:[#allocation9 + $0x2c] sm:$0xf]
        %v1102 = vld [vmem:[#allocation9 + $0x30] sm:$0xf]
        %v1103 = vld [vmem:[#allocation9 + $0x34] sm:$0xf]
        %v1104 = vld [vmem:[#allocation9 + $0x38] sm:$0xf]
        %v1105 = vld [vmem:[#allocation9 + $0x3c] sm:$0xf]
        %v1122 = vunpack.c.l.b16 %v1090
        %v1123 = vunpack.c.l.b16 %v1091
        %v1124 = vunpack.c.l.b16 %v1092
        %v1125 = vunpack.c.l.b16 %v1093
        %v1126 = vunpack.c.l.b16 %v1094
        %v1127 = vunpack.c.l.b16 %v1095
        %v1128 = vunpack.c.l.b16 %v1096
        %v1129 = vunpack.c.l.b16 %v1097
        %v1130 = vunpack.c.l.b16 %v1098
        %v1131 = vunpack.c.l.b16 %v1099
        %v1132 = vunpack.c.l.b16 %v1100
        %v1133 = vunpack.c.l.b16 %v1101
        %v1134 = vunpack.c.l.b16 %v1102
        %v1135 = vunpack.c.l.b16 %v1103
        %v1136 = vunpack.c.l.b16 %v1104
        %v1137 = vunpack.c.l.b16 %v1105
        %v1138 = vpack.c.b16 %v1123, %v1122
        %v1139 = vpack.c.b16 %v1125, %v1124
        %v1140 = vpack.c.b16 %v1127, %v1126
        %v1141 = vpack.c.b16 %v1129, %v1128
        %v1142 = vpack.c.b16 %v1131, %v1130
        %v1143 = vpack.c.b16 %v1133, %v1132
        %v1144 = vpack.c.b16 %v1135, %v1134
        %v1145 = vpack.c.b16 %v1137, %v1136
        %1154 = vmatprep.subr.bf16.mxu0 0
        %1155 = vmatpush1.bf16.msra.mxu0 %v1145
        %1156 = vmatprep.subr.bf16.mxu0 0
        %1157 = vmatpush1.bf16.msra.mxu0 %v1144
        %1158 = vmatprep.subr.bf16.mxu0 0
        %1159 = vmatpush1.bf16.msra.mxu0 %v1143
        %1160 = vmatprep.subr.bf16.mxu0 0
        %1161 = vmatpush1.bf16.msra.mxu0 %v1142
        %1162 = vmatprep.subr.bf16.mxu0 0
        %1163 = vmatpush1.bf16.msra.mxu0 %v1141
        %1164 = vmatprep.subr.bf16.mxu0 0
        %1165 = vmatpush1.bf16.msra.mxu0 %v1140
        %1166 = vmatprep.subr.bf16.mxu0 0
        %1167 = vmatpush1.bf16.msra.mxu0 %v1139
        %1168 = vmatprep.subr.bf16.mxu0 0
        %1169 = vmatpush1.bf16.msra.mxu0 %v1138
        %1170 = vmatprep.subr.bf16.mxu0 0
        %1171 = vmatpush2.bf16.msra.mxu0 0
        %1172 = vmatprep.subr.bf16.mxu0 0
        %1173 = vmatpush2.bf16.msra.mxu0 0
        %1174 = vmatprep.subr.bf16.mxu0 0
        %1175 = vmatpush2.bf16.msra.mxu0 0
        %1176 = vmatprep.subr.bf16.mxu0 0
        %1177 = vmatpush2.bf16.msra.mxu0 0
        %1178 = vmatprep.subr.bf16.mxu0 0
        %1179 = vmatpush2.bf16.msra.mxu0 0
        %1180 = vmatprep.subr.bf16.mxu0 0
        %1181 = vmatpush2.bf16.msra.mxu0 0
        %1182 = vmatprep.subr.bf16.mxu0 0
        %1183 = vmatpush2.bf16.msra.mxu0 0
        %1184 = vmatprep.subr.bf16.mxu0 0
        %1185 = vmatpush2.bf16.msra.mxu0 0
        %1186 = vmatprep.mubr.bf16.mxu0 0
        %1187 = vmatmul.mubr.bf16.gmra.mxu0 %v929
        %v1188 = vpop.f32.mrf.mxu0
        %v1189 = vadd.f32 0.0, %v1188
        %v1190 = vpop.f32.mrf.mxu0
        %v1191 = vpop.f32.mrf.mxu0
        %v1192 = vadd.f32 0.0, %v1191
        %v1193 = vpop.f32.mrf.mxu0
        %1194 = vmatprep.mubr.bf16.mxu0 0
        %1195 = vmatmul.mubr.bf16.gmra.mxu0 %v930
        %v1196 = vpop.f32.mrf.mxu0
        %v1197 = vadd.f32 0.0, %v1196
        %v1198 = vpop.f32.mrf.mxu0
        %v1199 = vpop.f32.mrf.mxu0
        %v1200 = vadd.f32 0.0, %v1199
        %v1201 = vpop.f32.mrf.mxu0
        %1202 = vmatprep.mubr.bf16.mxu0 0
        %1203 = vmatmul.mubr.bf16.gmra.mxu0 %v931
        %v1204 = vpop.f32.mrf.mxu0
        %v1205 = vadd.f32 0.0, %v1204
        %v1206 = vpop.f32.mrf.mxu0
        %v1207 = vpop.f32.mrf.mxu0
        %v1208 = vadd.f32 0.0, %v1207
        %v1209 = vpop.f32.mrf.mxu0
        %1210 = vmatprep.mubr.bf16.mxu0 0
        %1211 = vmatmul.mubr.bf16.gmra.mxu0 %v932
        %v1212 = vpop.f32.mrf.mxu0
        %v1213 = vadd.f32 0.0, %v1212
        %v1214 = vpop.f32.mrf.mxu0
        %v1215 = vpop.f32.mrf.mxu0
        %v1216 = vadd.f32 0.0, %v1215
        %v1217 = vpop.f32.mrf.mxu0
        %1218 = vmatprep.mubr.bf16.mxu0 0
        %1219 = vmatmul.mubr.bf16.gmra.mxu0 %v933
        %v1220 = vpop.f32.mrf.mxu0
        %v1221 = vadd.f32 0.0, %v1220
        %v1222 = vpop.f32.mrf.mxu0
        %v1223 = vpop.f32.mrf.mxu0
        %v1224 = vadd.f32 0.0, %v1223
        %v1225 = vpop.f32.mrf.mxu0
        %1226 = vmatprep.mubr.bf16.mxu0 0
        %1227 = vmatmul.mubr.bf16.gmra.mxu0 %v934
        %v1228 = vpop.f32.mrf.mxu0
        %v1229 = vadd.f32 0.0, %v1228
        %v1230 = vpop.f32.mrf.mxu0
        %v1231 = vpop.f32.mrf.mxu0
        %v1232 = vadd.f32 0.0, %v1231
        %v1233 = vpop.f32.mrf.mxu0
        %1234 = vmatprep.mubr.bf16.mxu0 0
        %1235 = vmatmul.mubr.bf16.gmra.mxu0 %v935
        %v1236 = vpop.f32.mrf.mxu0
        %v1237 = vadd.f32 0.0, %v1236
        %v1238 = vpop.f32.mrf.mxu0
        %v1239 = vpop.f32.mrf.mxu0
        %v1240 = vadd.f32 0.0, %v1239
        %v1241 = vpop.f32.mrf.mxu0
        %1242 = vmatprep.mubr.bf16.mxu0 0
        %1243 = vmatmul.mubr.bf16.gmra.mxu0 %v936
        %v1244 = vpop.f32.mrf.mxu0
        %v1245 = vadd.f32 0.0, %v1244
        %v1246 = vpop.f32.mrf.mxu0
        %v1247 = vpop.f32.mrf.mxu0
        %v1248 = vadd.f32 0.0, %v1247
        %v1249 = vpop.f32.mrf.mxu0
        %1250 = vdwg.mxu0
        %v1251 = vmul.f32 %v1028, %v728
        %v1252 = vmul.f32 %v1031, %v728
        %v1253 = vmul.f32 %v1036, %v728
        %v1254 = vmul.f32 %v1039, %v728
        %v1255 = vmul.f32 %v1044, %v728
        %v1256 = vmul.f32 %v1047, %v728
        %v1257 = vmul.f32 %v1052, %v728
        %v1258 = vmul.f32 %v1055, %v728
        %v1259 = vmul.f32 %v1060, %v728
        %v1260 = vmul.f32 %v1063, %v728
        %v1261 = vmul.f32 %v1068, %v728
        %v1262 = vmul.f32 %v1071, %v728
        %v1263 = vmul.f32 %v1076, %v728
        %v1264 = vmul.f32 %v1079, %v728
        %v1265 = vmul.f32 %v1084, %v728
        %v1266 = vmul.f32 %v1087, %v728
        %v1267 = vadd.f32 %v1251, %v750
        %v1268 = vadd.f32 %v1252, %v750
        %v1269 = vadd.f32 %v1253, %v750
        %v1270 = vadd.f32 %v1254, %v750
        %v1271 = vadd.f32 %v1255, %v750
        %v1272 = vadd.f32 %v1256, %v750
        %v1273 = vadd.f32 %v1257, %v750
        %v1274 = vadd.f32 %v1258, %v750
        %v1275 = vadd.f32 %v1259, %v750
        %v1276 = vadd.f32 %v1260, %v750
        %v1277 = vadd.f32 %v1261, %v750
        %v1278 = vadd.f32 %v1262, %v750
        %v1279 = vadd.f32 %v1263, %v750
        %v1280 = vadd.f32 %v1264, %v750
        %v1281 = vadd.f32 %v1265, %v750
        %v1282 = vadd.f32 %v1266, %v750
        %v1283 = vadd.f32 %v1267, %v1189
        %v1284 = vadd.f32 %v1268, %v1192
        %v1285 = vadd.f32 %v1269, %v1197
        %v1286 = vadd.f32 %v1270, %v1200
        %v1287 = vadd.f32 %v1271, %v1205
        %v1288 = vadd.f32 %v1272, %v1208
        %v1289 = vadd.f32 %v1273, %v1213
        %v1290 = vadd.f32 %v1274, %v1216
        %v1291 = vadd.f32 %v1275, %v1221
        %v1292 = vadd.f32 %v1276, %v1224
        %v1293 = vadd.f32 %v1277, %v1229
        %v1294 = vadd.f32 %v1278, %v1232
        %v1295 = vadd.f32 %v1279, %v1237
        %v1296 = vadd.f32 %v1280, %v1240
        %v1297 = vadd.f32 %v1281, %v1245
        %v1298 = vadd.f32 %v1282, %v1248
        %v1299 = vpack.c.bf16 %v1284, %v1283
        %v1300 = vpack.c.bf16 %v1286, %v1285
        %v1301 = vpack.c.bf16 %v1288, %v1287
        %v1302 = vpack.c.bf16 %v1290, %v1289
        %v1303 = vpack.c.bf16 %v1292, %v1291
        %v1304 = vpack.c.bf16 %v1294, %v1293
        %v1305 = vpack.c.bf16 %v1296, %v1295
        %v1306 = vpack.c.bf16 %v1298, %v1297
        %v1315 = vunpack.c.l.b16 %v1299
        %v1316 = vunpack.c.h.b16 %v1299
        %v1317 = vunpack.c.l.b16 %v1300
        %v1318 = vunpack.c.h.b16 %v1300
        %v1319 = vunpack.c.l.b16 %v1301
        %v1320 = vunpack.c.h.b16 %v1301
        %v1321 = vunpack.c.l.b16 %v1302
        %v1322 = vunpack.c.h.b16 %v1302
        %v1323 = vunpack.c.l.b16 %v1303
        %v1324 = vunpack.c.h.b16 %v1303
        %v1325 = vunpack.c.l.b16 %v1304
        %v1326 = vunpack.c.h.b16 %v1304
        %v1327 = vunpack.c.l.b16 %v1305
        %v1328 = vunpack.c.h.b16 %v1305
        %v1329 = vunpack.c.l.b16 %v1306
        %v1330 = vunpack.c.h.b16 %v1306
        %v1331 = vpack.c.b16 %v1315, %v1315
        %v1332 = vpack.c.b16 %v1316, %v1316
        %v1333 = vpack.c.b16 %v1317, %v1317
        %v1334 = vpack.c.b16 %v1318, %v1318
        %v1335 = vpack.c.b16 %v1319, %v1319
        %v1336 = vpack.c.b16 %v1320, %v1320
        %v1337 = vpack.c.b16 %v1321, %v1321
        %v1338 = vpack.c.b16 %v1322, %v1322
        %v1339 = vpack.c.b16 %v1323, %v1323
        %v1340 = vpack.c.b16 %v1324, %v1324
        %v1341 = vpack.c.b16 %v1325, %v1325
        %v1342 = vpack.c.b16 %v1326, %v1326
        %v1343 = vpack.c.b16 %v1327, %v1327
        %v1344 = vpack.c.b16 %v1328, %v1328
        %v1345 = vpack.c.b16 %v1329, %v1329
        %v1346 = vpack.c.b16 %v1330, %v1330
        %s1363 = scalar_lea.vmem %s328, 64 [#allocation10]
        %1364 = vst [vmem:[%s1363] sm:$0xf] %v1331
        %1365 = vst [vmem:[%s1363 + $0x4] sm:$0xf] %v1332
        %1366 = vst [vmem:[%s1363 + $0x8] sm:$0xf] %v1333
        %1367 = vst [vmem:[%s1363 + $0xc] sm:$0xf] %v1334
        %1368 = vst [vmem:[%s1363 + $0x10] sm:$0xf] %v1335
        %1369 = vst [vmem:[%s1363 + $0x14] sm:$0xf] %v1336
        %1370 = vst [vmem:[%s1363 + $0x18] sm:$0xf] %v1337
        %1371 = vst [vmem:[%s1363 + $0x1c] sm:$0xf] %v1338
        %1372 = vst [vmem:[%s1363 + $0x20] sm:$0xf] %v1339
        %1373 = vst [vmem:[%s1363 + $0x24] sm:$0xf] %v1340
        %1374 = vst [vmem:[%s1363 + $0x28] sm:$0xf] %v1341
        %1375 = vst [vmem:[%s1363 + $0x2c] sm:$0xf] %v1342
        %1376 = vst [vmem:[%s1363 + $0x30] sm:$0xf] %v1343
        %1377 = vst [vmem:[%s1363 + $0x34] sm:$0xf] %v1344
        %1378 = vst [vmem:[%s1363 + $0x38] sm:$0xf] %v1345
        %1379 = vst [vmem:[%s1363 + $0x3c] sm:$0xf] %v1346
        %s1380 = sand.u32 %s180, 1
        %s1381 = scalar_lea.sflag [#allocation4], %s1380
        %s1382 = sand.u32 %s180, 1
        %s1383 = smul.addr %s1382, 128
        %s1384 = scalar_lea.vmem [#allocation10], %s1383
        // Predicated region
        $region61: #{tpu_custom_call.1} parent=43 // pred_check
          %p1385 = pneg %p190
        $region62: #{tpu_custom_call.1} parent=43 // pred_check_branch
          %1387 = sbr.rel (%p1385) target = $region64
        $region63: #{tpu_custom_call.1} parent=43 // pred_region
          %s1388 = smul.u32 32, %s30
          %s1390 = ssub.s32 2048, 2048
          %1391 = vsyncadd %s1381, %s1390
          %s1392 = smul.addr %s29, 32
          %s1393 = sadd.s32 %s1388, %s1392
          %s1394 = smul.addr %s1393, 64
          %s1395 = scalar_lea.hbm %s6, %s1394
          %s1396 = sshll.u32 %s1384, 4
          %s1397 = int_to_ptr.vmem [resolvable:$true] %s1396
          %1402 = dma.vmem_to_hbm [thread:$0]  %s1397, 2048, %s1395, %s1381, 64, 64, 4
        $region64: #{tpu_custom_call.1} parent=43 // pred_fallthru
          _
      $region44: #{tpu_custom_call.1} parent=5 // pred_fallthru
        _
      %p1403 = scmp.le.s32.totalorder 2, %s20
      // Predicated region
      $region65: #{tpu_custom_call.1} parent=5 // pred_check
        %p1404 = pneg %p1403
      $region66: #{tpu_custom_call.1} parent=5 // pred_check_branch
        %1406 = sbr.rel (%p1404) target = $region68
      $region67: #{tpu_custom_call.1} parent=5 // pred_region
        %s1407 = ssub.s32 %s20, 2
        // Predicated region
        $region69: #{tpu_custom_call.1} parent=67 // pred_check
          %p1408 = pneg %p196
        $region70: #{tpu_custom_call.1} parent=67 // pred_check_branch
          %1410 = sbr.rel (%p1408) target = $region72
        $region71: #{tpu_custom_call.1} parent=67 // pred_region
          %s1411 = sand.u32 %s181, 1
          %s1412 = scalar_lea.sflag [#allocation4], %s1411
          %s1413 = sand.u32 %s181, 1
          %s1414 = smul.addr %s1413, 128
          %s1415 = scalar_lea.vmem [#allocation10], %s1414
          %1416 = dma.done %s1412, 2048
        $region72: #{tpu_custom_call.1} parent=67 // pred_fallthru
          _
      $region68: #{tpu_custom_call.1} parent=5 // pred_fallthru
        _
    $region6: #{tpu_custom_call.1} parent=1 // loop_footer
      %s24 = sadd.s32 1, %s20
    $region7: #{tpu_custom_call.1} parent=1 // loop_footer_branch
      %19 = sbr.rel target = $region3
    $region8: #{tpu_custom_call.1} parent=1 // loop_exit
      _
    %1417 = vsyncpa [#allocation3], 1
    %s1418 = scalar_lea.sflag [#allocation3], 1
    %1419 = vsyncpa %s1418, 1
    %1420 = vsyncpa [#allocation8], 1
    %1421 = vsyncpa [#allocation4], 1
    %s1422 = scalar_lea.sflag [#allocation4], 1
    %1423 = vsyncpa %s1422, 1
    %1424 = vsyncpa [#allocation5], 1
    %s1425 = scalar_lea.sflag [#allocation5], 1
    %1426 = vsyncpa %s1425, 1

</llo_original>
